<compile_context>
chip_gen: v6e
topology: v6e:2x2x1
jax: 0.10.0
libtpu: 0.0.40
codegen_flags: <defaults>
</compile_context>

<pallas_src>
import functools

import jax
import jax.numpy as jnp
from jax.experimental import pallas as pl
from jax.experimental.pallas import tpu as pltpu


def _round_up(x: int, m: int) -> int:
    return (x + m - 1) // m * m


# ----------------------------------------------------------------------------
# Pallas kernel: contrastive hinge over softmax(logits)[:, 1]
# ----------------------------------------------------------------------------
def _make_cat_loss_kernel(margin: float, g: int, b_actual: int, tb: int,
                          pred_dtype, mask_needed: bool):
    def kernel(logits_ref, pred_ref, psum_ref):
        # logits_ref: (2, G, TB) wire dtype (bf16/f32), class-major, B on lanes
        logits = logits_ref[...].astype(jnp.float32)
        l0 = logits[0]                       # (G, TB)
        l1 = logits[1]                       # (G, TB)
        # softmax([l0, l1])[..., 1] == sigmoid(l1 - l0): EUP exp + VPU only.
        pred = jax.nn.sigmoid(l1 - l0)       # (G, TB) f32
        pred_ref[...] = pred.astype(pred_dtype)   # lane-dense store, wire dtype

        pos = pred[0:1, :]                   # (1, TB): positives broadcast
        neg = pred[1:, :]                    # (G-1, TB): negatives
        hinge = jnp.maximum(margin - pos + neg, 0.0)

        if mask_needed:
            # Only padded / out-of-bounds lanes (last tile) need masking; the
            # (1, TB) iota+compare+select is trivially cheap and NaN-safe.
            lane = jax.lax.broadcasted_iota(jnp.int32, (1, tb), dimension=1)
            col = pl.program_id(0) * tb + lane
            hinge = jnp.where(col < b_actual, hinge, 0.0)

        # Reduce the whole tile to one f32 scalar in-kernel (sublane reduce
        # then lane reduce); the HBM writeback per tile is 4 bytes.
        part = jnp.sum(hinge, axis=0, keepdims=True)   # (1, TB)
        part = jnp.sum(part, axis=1, keepdims=True)    # (1, 1)
        psum_ref[...] = part[None]                     # (1, 1, 1)

    return kernel


def cat_loss_forward(logits, labels=None, *, num_negatives=3, margin=1.0,
                     log_key="loss_no_reg", tile_b=32768, pred_dtype=None,
                     pallas_min_b=256):
    """Contrastive catLoss forward. Returns (pred, loss, to_log)."""
    del labels  # the positives-first hinge does not use labels numerically
    g = num_negatives + 1
    assert g >= 2, "need at least one negative per group (num_negatives >= 1)"
    n = logits.shape[0]
    assert n % g == 0, "batch must be divisible by num_negatives + 1"
    b = n // g
    pred_dtype = logits.dtype if pred_dtype is None else jnp.dtype(pred_dtype)

    if b < pallas_min_b:
        # Small-batch fast path: pallas_call fixed overhead dwarfs the math.
        l32 = logits.astype(jnp.float32)
        pred_f32 = jax.nn.sigmoid(l32[:, 1] - l32[:, 0]).reshape(b, g)
        hinge = jnp.maximum(margin - pred_f32[:, 0:1] + pred_f32[:, 1:], 0.0)
        loss = jnp.mean(hinge)
        pred = pred_f32.astype(pred_dtype)
        return pred, loss, {log_key: jax.lax.stop_gradient(loss)}

    # Class-major, B-on-lanes layout: (N, 2) -> (B, G, 2) -> (2, G, B).
    # With allow_input_fusion this relayout fuses into the pallas operand
    # instead of being a standalone HBM read+write pass.
    logits_cgb = jnp.transpose(logits.reshape(b, g, 2), (2, 1, 0))

    # Pad only to the 128-lane boundary (at most 127 lanes); partial trailing
    # tiles relative to tb are handled by Pallas plus the in-kernel mask.
    b_pad = _round_up(b, 128)
    if b_pad != b:
        logits_cgb = jnp.pad(logits_cgb, ((0, 0), (0, 0), (0, b_pad - b)))

    # Lane tile: big (amortize the ~0.35us per-grid-step overhead), multiple of
    # 128, capped so the double-buffered VMEM footprint stays well under the
    # smallest default scoped VMEM (v5e: 16 MiB).
    tb = min(_round_up(max(int(tile_b), 128), 128), b_pad)
    bytes_per_lane_buffered = 2 * (2 * g * logits.dtype.itemsize
                                   + g * pred_dtype.itemsize)
    tb_cap = max(128, (12 * 1024 * 1024 // bytes_per_lane_buffered) // 128 * 128)
    tb = min(tb, tb_cap)
    # Give v7x's second TensorCore something to do when the batch is big
    # enough that splitting does not re-introduce overhead-bound tiles.
    if b_pad >= 2 * 8192 and tb > _round_up(pl.cdiv(b_pad, 2), 128):
        tb = _round_up(pl.cdiv(b_pad, 2), 128)
    num_tiles = pl.cdiv(b_pad, tb)

    kernel = _make_cat_loss_kernel(float(margin), g, b, tb, pred_dtype,
                                   mask_needed=(b % tb != 0))

    pred_gb, psum = pl.pallas_call(
        kernel,
        out_shape=(
            jax.ShapeDtypeStruct((g, b_pad), pred_dtype),        # pred (G, B_pad)
            jax.ShapeDtypeStruct((num_tiles, 1, 1), jnp.float32),  # per-tile sums
        ),
        grid=(num_tiles,),
        in_specs=[
            pl.BlockSpec((2, g, tb), lambda i: (0, 0, i)),
        ],
        out_specs=(
            pl.BlockSpec((g, tb), lambda i: (0, i)),
            pl.BlockSpec((1, 1, 1), lambda i: (i, 0, 0)),
        ),
        compiler_params=pltpu.CompilerParams(
            dimension_semantics=("parallel",),   # independent tiles -> megacore
            allow_input_fusion=[True],           # fuse reshape/transpose/pad in
        ),
    )(logits_cgb)

    loss = jnp.sum(psum) / jnp.float32(b * (g - 1))
    # (B, G) scores to match the PyTorch view; consumers that can take the
    # class-major (G, B) layout should read pred_gb[:, :b] directly and skip
    # this relayout.
    pred = pred_gb[:, :b].T
    to_log = {log_key: jax.lax.stop_gradient(loss)}
    return pred, loss, to_log


# ----------------------------------------------------------------------------
# CombiLoss combinator (mirrors the PyTorch module)
# ----------------------------------------------------------------------------
def combi_loss_forward(losses, weights=None):
    weights = [1.0 for _ in losses] if not weights else weights

    def forward(*args, **kwargs):
        loss = 0.0
        scores = None
        to_log = {}
        for w, loss_fn in zip(weights, losses):
            curr_scores, curr_loss, curr_log = loss_fn(*args, **kwargs)
            if curr_scores is not None:
                scores = curr_scores
            loss = loss + w * curr_loss
            to_log.update(curr_log)
        return scores, loss, to_log

    return forward


# ----------------------------------------------------------------------------
# Pure-JAX reference
# ----------------------------------------------------------------------------
def _reference_cat(logits, num_negatives, margin):
    g = num_negatives + 1
    pred = jax.nn.softmax(logits.astype(jnp.float32), axis=-1)[:, 1].reshape(-1, g)
    pos = pred[:, 0:1]
    neg = pred[:, 1:]
    loss = jnp.mean(jnp.maximum(margin - pos + neg, 0.0))
    return pred, loss


if __name__ == "__main__":
    key = jax.random.PRNGKey(0)
    num_negatives = 3
    group = num_negatives + 1

    # --- kernel path: moderately sized, NOT 128-aligned group batch ---------
    batch_groups = 300                               # b=300 -> pad to 384 lanes
    n = batch_groups * group                         # 1200 rows of binary logits
    k1, k2 = jax.random.split(key)
    logits = jax.random.normal(k1, (n, 2), dtype=jnp.float32)
    labels = jnp.tile(
        jnp.array([1.0] + [0.0] * num_negatives, dtype=jnp.float32), batch_groups
    )

    # CombiLoss over two contrastive sub-losses with different margins.
    losses = [
        functools.partial(cat_loss_forward, num_negatives=num_negatives,
                          margin=1.0, log_key="hinge_m1"),
        functools.partial(cat_loss_forward, num_negatives=num_negatives,
                          margin=0.5, log_key="hinge_m05"),
    ]
    weights = [1.0, 0.5]
    combi = combi_loss_forward(losses, weights)

    scores, loss, to_log = combi(logits, labels)
    jax.block_until_ready((scores, loss))

    ref_pred1, ref_loss1 = _reference_cat(logits, num_negatives, 1.0)
    ref_pred2, ref_loss2 = _reference_cat(logits, num_negatives, 0.5)
    ref_loss = weights[0] * ref_loss1 + weights[1] * ref_loss2

    assert scores.shape == (batch_groups, group)
    assert jnp.allclose(scores, ref_pred2, atol=1e-5, rtol=1e-5)
    assert jnp.allclose(loss, ref_loss, atol=1e-5, rtol=1e-5)
    assert set(to_log.keys()) == {"hinge_m1", "hinge_m05"}
    assert jnp.allclose(to_log["hinge_m1"], ref_loss1, atol=1e-5, rtol=1e-5)
    assert jnp.allclose(to_log["hinge_m05"], ref_loss2, atol=1e-5, rtol=1e-5)

    # --- multi-tile + partial trailing tile path (tb=128, 3 tiles) ----------
    pred_mt, loss_mt, _ = cat_loss_forward(
        logits, labels, num_negatives=num_negatives, margin=1.0, tile_b=128)
    jax.block_until_ready((pred_mt, loss_mt))
    assert jnp.allclose(pred_mt, ref_pred1, atol=1e-5, rtol=1e-5)
    assert jnp.allclose(loss_mt, ref_loss1, atol=1e-5, rtol=1e-5)

    # --- bf16 on the wire: bf16 in, bf16 pred out, f32 math in-kernel -------
    logits_bf16 = logits.astype(jnp.bfloat16)
    pred_bf, loss_bf, _ = cat_loss_forward(
        logits_bf16, labels, num_negatives=num_negatives, margin=1.0)
    jax.block_until_ready((pred_bf, loss_bf))
    ref_pred_bf, ref_loss_bf = _reference_cat(logits_bf16, num_negatives, 1.0)
    assert pred_bf.dtype == jnp.bfloat16
    assert jnp.allclose(pred_bf.astype(jnp.float32), ref_pred_bf,
                        atol=8e-3, rtol=8e-3)
    assert jnp.allclose(loss_bf, ref_loss_bf, atol=1e-4, rtol=1e-4)

    # --- tiny-batch fast path (skips pallas_call entirely) ------------------
    small_groups = 6
    logits_small = jax.random.normal(k2, (small_groups * group, 2), jnp.float32)
    sp, sl, _ = cat_loss_forward(logits_small, None,
                                 num_negatives=num_negatives, margin=1.0)
    jax.block_until_ready((sp, sl))
    rp, rl = _reference_cat(logits_small, num_negatives, 1.0)
    assert sp.shape == (small_groups, group)
    assert jnp.allclose(sp, rp, atol=1e-5, rtol=1e-5)
    assert jnp.allclose(sl, rl, atol=1e-5, rtol=1e-5)

    print("KERNEL_OK")
</pallas_src>

<mosaic_0001>
module attributes {stable_mosaic.version = 11 : i64} {
  func.func @kernel(%arg0: i32, %arg1: memref<2x4x384xf32, #tpu.memory_space<vmem>>, %arg2: memref<4x384xf32, #tpu.memory_space<vmem>>, %arg3: memref<1x1x1xf32, #tpu.memory_space<vmem>>) attributes {dimension_semantics = [#tpu.dimension_semantics<parallel>], iteration_bounds = array<i64: 1>, scalar_prefetch = 0 : i64, scratch_operands = 0 : i64, tpu.core_type = #tpu.core_type<tc>, window_params = [{transform_indices = @transform_0, window_bounds = array<i64: 2, 4, 384>}, {transform_indices = @transform_1, window_bounds = array<i64: 4, 384>}, {transform_indices = @transform_2, window_bounds = array<i64: 1, 1, 1>}]} {
    %c0 = arith.constant 0 : index
    %c0_0 = arith.constant 0 : index
    %c0_1 = arith.constant 0 : index
    %0 = vector.load %arg1[%c0, %c0_0, %c0_1] : memref<2x4x384xf32, #tpu.memory_space<vmem>>, vector<2x4x384xf32>
    %1 = vector.extract_strided_slice %0 {offsets = [0, 0, 0], sizes = [1, 4, 384], strides = [1, 1, 1]} : vector<2x4x384xf32> to vector<1x4x384xf32>
    %2 = vector.shape_cast %1 : vector<1x4x384xf32> to vector<4x384xf32>
    %3 = vector.extract_strided_slice %0 {offsets = [1, 0, 0], sizes = [1, 4, 384], strides = [1, 1, 1]} : vector<2x4x384xf32> to vector<1x4x384xf32>
    %4 = vector.shape_cast %3 : vector<1x4x384xf32> to vector<4x384xf32>
    %5 = arith.subf %4, %2 : vector<4x384xf32>
    %6 = arith.negf %5 : vector<4x384xf32>
    %7 = math.exp %6 : vector<4x384xf32>
    %cst = arith.constant 1.000000e+00 : f32
    %8 = vector.broadcast %cst : f32 to vector<4x384xf32>
    %9 = arith.addf %8, %7 : vector<4x384xf32>
    %10 = arith.divf %8, %9 : vector<4x384xf32>
    %c0_2 = arith.constant 0 : index
    %c0_3 = arith.constant 0 : index
    %11 = vector.load %arg2[%c0_2, %c0_3] : memref<4x384xf32, #tpu.memory_space<vmem>>, vector<4x384xf32>
    tpu.vector_store %arg2[%c0_2, %c0_3], %10 {strides = array<i32>} : memref<4x384xf32, #tpu.memory_space<vmem>>, vector<4x384xf32>,
    %12 = vector.extract_strided_slice %10 {offsets = [0, 0], sizes = [1, 384], strides = [1, 1]} : vector<4x384xf32> to vector<1x384xf32>
    %13 = vector.extract_strided_slice %10 {offsets = [1, 0], sizes = [3, 384], strides = [1, 1]} : vector<4x384xf32> to vector<3x384xf32>
    %cst_4 = arith.constant 1.000000e+00 : f32
    %14 = vector.broadcast %cst_4 : f32 to vector<1x384xf32>
    %15 = arith.subf %14, %12 : vector<1x384xf32>
    %16 = vector.broadcast %15 : vector<1x384xf32> to vector<3x384xf32>
    %17 = arith.addf %16, %13 : vector<3x384xf32>
    %cst_5 = arith.constant 0.000000e+00 : f32
    %18 = vector.broadcast %cst_5 : f32 to vector<3x384xf32>
    %19 = arith.maximumf %17, %18 : vector<3x384xf32>
    %20 = tpu.iota {dimensions = array<i32: 1>} : vector<1x384xi32>
    %c384_i32 = arith.constant 384 : i32
    %21 = arith.muli %arg0, %c384_i32 : i32
    %22 = vector.broadcast %21 : i32 to vector<1x384xi32>
    %23 = arith.addi %22, %20 : vector<1x384xi32>
    %c300_i32 = arith.constant 300 : i32
    %24 = vector.broadcast %c300_i32 : i32 to vector<1x384xi32>
    %25 = arith.cmpi slt, %23, %24 : vector<1x384xi32>
    %cst_6 = arith.constant 0.000000e+00 : f32
    %26 = vector.shape_cast %25 : vector<1x384xi1> to vector<1x384xi1>
    %27 = vector.broadcast %26 : vector<1x384xi1> to vector<3x384xi1>
    %28 = vector.broadcast %cst_6 : f32 to vector<3x384xf32>
    %29 = arith.select %27, %19, %28 : vector<3x384xi1>, vector<3x384xf32>
    %cst_7 = arith.constant dense<0.000000e+00> : vector<384xf32>
    %30 = vector.multi_reduction <add>, %29, %cst_7 [0] : vector<3x384xf32> to vector<384xf32>
    %31 = vector.shape_cast %30 : vector<384xf32> to vector<1x384xf32>
    %cst_8 = arith.constant dense<0.000000e+00> : vector<1xf32>
    %32 = vector.multi_reduction <add>, %31, %cst_8 [1] : vector<1x384xf32> to vector<1xf32>
    %33 = vector.shape_cast %32 : vector<1xf32> to vector<1x1xf32>
    %34 = vector.shape_cast %33 : vector<1x1xf32> to vector<1x1x1xf32>
    %c0_9 = arith.constant 0 : index
    %c0_10 = arith.constant 0 : index
    %c0_11 = arith.constant 0 : index
    %35 = vector.load %arg3[%c0_9, %c0_10, %c0_11] : memref<1x1x1xf32, #tpu.memory_space<vmem>>, vector<1x1x1xf32>
    tpu.vector_store %arg3[%c0_9, %c0_10, %c0_11], %34 {strides = array<i32>} : memref<1x1x1xf32, #tpu.memory_space<vmem>>, vector<1x1x1xf32>,
    return
  }
  func.func @transform_0(%arg0: i32) -> (i32, i32, i32) {
    %c0_i32 = arith.constant 0 : i32
    %c0_i32_0 = arith.constant 0 : i32
    %c0_i32_1 = arith.constant 0 : i32
    return %c0_i32, %c0_i32_0, %arg0 : i32, i32, i32
  }
  func.func @transform_1(%arg0: i32) -> (i32, i32) {
    %c0_i32 = arith.constant 0 : i32
    %c0_i32_0 = arith.constant 0 : i32
    return %c0_i32, %arg0 : i32, i32
  }
  func.func @transform_2(%arg0: i32) -> (i32, i32, i32) {
    %c0_i32 = arith.constant 0 : i32
    %c0_i32_0 = arith.constant 0 : i32
    %c0_i32_1 = arith.constant 0 : i32
    return %arg0, %c0_i32, %c0_i32_0 : i32, i32, i32
  }
}

</mosaic_0001>

<llo_original>
// kernel: tpu_custom_call.1
$region0: #{tpu_custom_call.1}
  #allocation0 [shape = 'u32[]', space=smem, size = 0x4, offset = 0x4, fixed_abs, tag = 'smem constant byte address 0x4 - core index']
  #allocation1 [shape = 'u32[144,128]{1,0:T(1,128)}', space=vmem, size = 0x12000, scoped, tag = 'internal scratch']
  %s0 = inlined_call_operand.hbm [shape: f32[2,4,384], index: 0, kind: input, shape index: {}]
  %s1 = inlined_call_operand.hbm [shape: f32[4,384], index: 1, kind: output, shape index: {0}]
  %s2 = inlined_call_operand.hbm [shape: f32[1,1,1], index: 2, kind: output, shape index: {1}]
  %3 = xla_tuple %s1, %s2
  %s4 = sld [smem:[#allocation0]]
  $region26: #{tpu_custom_call.1} parent=0
    _
  %s6 = ssub.s32 1, %s4
  %s7 = scalar_select 0, %s6, %s4
  $region1: #{tpu_custom_call.1} parent=0
    #allocation2 [shape = 'u8[12288]{0}', space=vmem, size = 0x3000, scoped, tag = 'input window, operand 0, single buffered']
    #allocation3 [shape = 's32[1]{0}', space=sflag, size = 0x4, scoped, tag = 'scoped memory for tpu_custom_call.1']
    #allocation4 [shape = 's32[1]{0}', space=sflag, size = 0x4, scoped, tag = 'scoped memory for tpu_custom_call.1']
    #allocation5 [shape = 'u8[6144]{0}', space=vmem, size = 0x1800, scoped, tag = 'output window, operand 0, single buffered']
    #allocation6 [shape = 'u8[512]{0}', space=vmem, size = 0x400, scoped, tag = 'output window, operand 1, single buffered']
    #allocation7 [shape = 's32[1]{0}', space=sflag, size = 0x4, scoped, tag = 'scoped memory for tpu_custom_call.1']
    %8 = vsyncpa [#allocation3], 0
    %9 = vsyncpa [#allocation4], 0
    %10 = vsyncpa [#allocation7], 0
    // Predicated region
    $region2: #{tpu_custom_call.1} parent=1 // pred_check
      _
    $region3: #{tpu_custom_call.1} parent=1 // pred_check_branch
      %12 = sbr.rel (0) target = $region5
    $region4: #{tpu_custom_call.1} parent=1 // pred_region
      %s14 = ssub.s32 384, 384
      %15 = vsyncadd [#allocation3], %s14
      %s16 = sshll.u32 [#allocation2], 4
      %s17 = int_to_ptr.vmem [resolvable:$true] %s16
      %22 = dma.hbm_to_vmem [thread:$0]  %s0, 384, %s17, [#allocation3], 192, 192, 12
    $region5: #{tpu_custom_call.1} parent=1 // pred_fallthru
      _
    // Predicated region
    $region6: #{tpu_custom_call.1} parent=1 // pred_check
      _
    $region7: #{tpu_custom_call.1} parent=1 // pred_check_branch
      %24 = sbr.rel (0) target = $region9
    $region8: #{tpu_custom_call.1} parent=1 // pred_region
      %25 = dma.done [#allocation3], 384
    $region9: #{tpu_custom_call.1} parent=1 // pred_fallthru
      _
    %v26 = vld [vmem:[#allocation2] sm:$0xff]
    %v27 = vld [vmem:[#allocation2 + $0x8] sm:$0xf]
    %v28 = vld [vmem:[#allocation2 + $0xc] sm:$0xff]
    %v29 = vld [vmem:[#allocation2 + $0x14] sm:$0xf]
    %v30 = vsub.f32 %v28, %v26
    %v31 = vsub.f32 %v29, %v27
    %v32 = vxor.u32 %v30, 2147483648
    %v33 = vxor.u32 %v31, 2147483648
    %v34 = vmul.f32 %v32, 1.442695
    %v35 = vpow.pop %v34
    %v36 = vmul.f32 %v33, 1.442695
    %v37 = vpow.pop %v36
    %v38 = vadd.f32 %v35, 1.0
    %v39 = vadd.f32 %v37, 1.0
    %v40 = vrcp.pop %v38
    %v41 = vmul.f32 1.0, %v40
    %v42 = vrcp.pop %v39
    %v43 = vmul.f32 1.0, %v42
    %44 = vst [vmem:[#allocation5] sm:$0xff] %v41
    %45 = vst [vmem:[#allocation5 + $0x8] sm:$0xf] %v43
    %v46 = vsub.f32 1.0, %v41
    %v47 = vsub.f32 1.0, %v43
    %v50 = vlaneseq
    %v51 = vshrl.u32 %v50, 7
    %v52 = vsub.s32 0, %v51
    %v53 = vrot.slane %v46, %v52
    %v54 = vlaneseq
    %v55 = vshrl.u32 %v54, 7
    %v56 = vsub.s32 4, %v55
    %v57 = vrot.slane %v46, %v56
    %v58 = vlaneseq
    %v59 = vshrl.u32 %v58, 7
    %v60 = vsub.s32 0, %v59
    %v61 = vrot.slane %v47, %v60
    %v65 = vlaneseq
    %v66 = vshrl.u32 %v65, 7
    %v67 = vsub.s32 0, %v66
    %v68 = vrot.slane %v53, %v67
    %v69 = vlaneseq
    %v70 = vshrl.u32 %v69, 7
    %v71 = vsub.s32 0, %v70
    %v72 = vrot.slane %v57, %v71
    %v73 = vlaneseq
    %v74 = vshrl.u32 %v73, 7
    %v75 = vsub.s32 0, %v74
    %v76 = vrot.slane %v61, %v75
    %v79 = vcombine.high %v41, %v41
    %v80 = vrot.slane %v41, 1
    %v81 = vrot.slane %v79, 1
    %v82 = vrot.slane %v43, 1
    %v86 = vadd.f32 %v68, %v80
    %v87 = vadd.f32 %v72, %v81
    %v88 = vadd.f32 %v76, %v82
    %v89 = vmax.f32 %v86, 0.0
    %v90 = vmax.f32 %v87, 0.0
    %v91 = vmax.f32 %v88, 0.0
    %v92 = vlaneseq
    %v93 = vand.u32 %v92, 127
    %v94 = vadd.s32 %v93, 128
    %v95 = vadd.s32 %v93, 256
    %s96 = smul.u32 0, 384
    %v97 = vstv %s96
    %v98 = vadd.s32 %v97, %v93
    %v99 = vadd.s32 %v97, %v94
    %v100 = vadd.s32 %v97, %v95
    %vm101 = vcmp.lt.s32.totalorder %v98, 300
    %vm102 = vcmp.lt.s32.totalorder %v99, 300
    %vm103 = vcmp.lt.s32.totalorder %v100, 300
    %v104 = vsel %vm101, 1, 0
    %v105 = vsel %vm102, 1, 0
    %v106 = vsel %vm103, 1, 0
    %vm107 = vcmp.eq.s32.totalorder %v104, 1
    %vm108 = vcmp.eq.s32.totalorder %v105, 1
    %vm109 = vcmp.eq.s32.totalorder %v106, 1
    %v110 = vsel %vm107, %v89, 0.0
    %v111 = vsel %vm108, %v90, 0.0
    %v112 = vsel %vm109, %v91, 0.0
    %vm113 = vcmask 1042432
    %v114 = vsel %vm113, %v110, 0.0
    %v115 = vrot.slane %v114, 4
    %v116 = vadd.f32 %v114, %v115
    %v117 = vrot.slane %v116, 2
    %v118 = vadd.f32 %v116, %v117
    %v119 = vrot.slane %v118, 1
    %v120 = vadd.f32 %v118, %v119
    %v121 = vsel %vm113, %v111, 0.0
    %v122 = vrot.slane %v121, 4
    %v123 = vadd.f32 %v121, %v122
    %v124 = vrot.slane %v123, 2
    %v125 = vadd.f32 %v123, %v124
    %v126 = vrot.slane %v125, 1
    %v127 = vadd.f32 %v125, %v126
    %v128 = vsel %vm113, %v112, 0.0
    %v129 = vrot.slane %v128, 4
    %v130 = vadd.f32 %v128, %v129
    %v131 = vrot.slane %v130, 2
    %v132 = vadd.f32 %v130, %v131
    %v133 = vrot.slane %v132, 1
    %v134 = vadd.f32 %v132, %v133
    %v135 = vadd.f32 %v120, %v127
    %v136 = vadd.f32 %v135, %v134
    %137 = vadd.xlane.f32.xlu0 %v136
    %v138 = vpop.xlane.xlu0 %137
    %vm139 = vcmask 0
    %140 = vst.msk [vmem:[#allocation6] sm:$0x1] %vm139, %v138
    // Predicated region
    $region10: #{tpu_custom_call.1} parent=1 // pred_check
      _
    $region11: #{tpu_custom_call.1} parent=1 // pred_check_branch
      %142 = sbr.rel (0) target = $region13
    $region12: #{tpu_custom_call.1} parent=1 // pred_region
      %s144 = ssub.s32 192, 192
      %145 = vsyncadd [#allocation4], %s144
      %s147 = sshll.u32 [#allocation5], 4
      %s148 = int_to_ptr.vmem [resolvable:$true] %s147
      %150 = dma.vmem_to_hbm [thread:$0]  %s148, 192, %s1, [#allocation4]
    $region13: #{tpu_custom_call.1} parent=1 // pred_fallthru
      _
    // Predicated region
    $region14: #{tpu_custom_call.1} parent=1 // pred_check
      _
    $region15: #{tpu_custom_call.1} parent=1 // pred_check_branch
      %152 = sbr.rel (0) target = $region17
    $region16: #{tpu_custom_call.1} parent=1 // pred_region
      %s154 = ssub.s32 16, 16
      %155 = vsyncadd [#allocation7], %s154
      %s157 = sshll.u32 [#allocation6], 4
      %s158 = int_to_ptr.vmem [resolvable:$true] %s157
      %160 = dma.vmem_to_hbm [thread:$0]  %s158, 16, %s2, [#allocation7]
    $region17: #{tpu_custom_call.1} parent=1 // pred_fallthru
      _
    // Predicated region
    $region18: #{tpu_custom_call.1} parent=1 // pred_check
      _
    $region19: #{tpu_custom_call.1} parent=1 // pred_check_branch
      %162 = sbr.rel (0) target = $region21
    $region20: #{tpu_custom_call.1} parent=1 // pred_region
      %163 = dma.done [#allocation4], 192
    $region21: #{tpu_custom_call.1} parent=1 // pred_fallthru
      _
    // Predicated region
    $region22: #{tpu_custom_call.1} parent=1 // pred_check
      _
    $region23: #{tpu_custom_call.1} parent=1 // pred_check_branch
      %165 = sbr.rel (0) target = $region25
    $region24: #{tpu_custom_call.1} parent=1 // pred_region
      %166 = dma.done [#allocation7], 16
    $region25: #{tpu_custom_call.1} parent=1 // pred_fallthru
      _
    %167 = vsyncpa [#allocation3], 1
    %168 = vsyncpa [#allocation4], 1
    %169 = vsyncpa [#allocation7], 1

</llo_original>
